<compile_context>
chip_gen: v7x
topology: tpu7x:2x2x1
jax: 0.10.0
libtpu: 0.0.40
codegen_flags: <defaults>
</compile_context>

<pallas_src>
import math
import functools

import jax
import jax.numpy as jnp
from jax.experimental import pallas as pl
from jax.experimental.pallas import tpu as pltpu


# --------------------------------------------------------------------------
# Kernels
# --------------------------------------------------------------------------
def _pe_add_kernel(x_ref, pe_ref, o_ref):
    # x_ref: (TR, TC), pe_ref: (1, TC) -> broadcast over rows (batch).
    o_ref[...] = (x_ref[...] + pe_ref[...]).astype(o_ref.dtype)


def _pe_add_dropout_kernel(seed_ref, x_ref, pe_ref, o_ref, *, threshold, scale):
    """TPU path: in-kernel hardware PRNG, integer-threshold dropout."""
    y = x_ref[...] + pe_ref[...]
    # Unique seed per grid step so the dropout mask does not repeat tile-to-tile.
    step = pl.program_id(0) * pl.num_programs(1) + pl.program_id(1)
    pltpu.prng_seed(seed_ref[0] + step)
    bits = pltpu.prng_random_bits(y.shape)
    if bits.dtype != jnp.uint32:        # only bitcast if the HW draw is not u32
        bits = pltpu.bitcast(bits, jnp.uint32)
    # keep with probability 1 - p  (threshold = round(p * 2^32))
    keep = bits >= jnp.uint32(threshold)
    o_ref[...] = jnp.where(keep, y * scale, jnp.zeros_like(y)).astype(o_ref.dtype)


def _pe_add_bits_kernel(x_ref, pe_ref, bits_ref, o_ref, *, threshold, scale):
    """Portable path (CPU / interpret): dropout from precomputed random bits."""
    y = x_ref[...] + pe_ref[...]
    keep = bits_ref[...] >= jnp.uint32(threshold)
    o_ref[...] = jnp.where(keep, y * scale, jnp.zeros_like(y)).astype(o_ref.dtype)


# --------------------------------------------------------------------------
# PE table (constant buffer — built once at module setup, like torch)
# --------------------------------------------------------------------------
def make_positional_encoding(d_model: int, seq_len: int):
    position = jnp.arange(seq_len, dtype=jnp.float32)[:, None]            # (S, 1)
    div_term = jnp.exp(
        jnp.arange(0, d_model, 2, dtype=jnp.float32) * (-math.log(10000.0) / d_model)
    )                                                                      # (D/2,)
    ang = position * div_term                                              # (S, D/2)
    pe = jnp.zeros((seq_len, d_model), dtype=jnp.float32)
    pe = pe.at[:, 0::2].set(jnp.sin(ang))
    pe = pe.at[:, 1::2].set(jnp.cos(ang))
    return pe[None, :, :]                                                  # (1, S, D)


def prepare_pe(pe):
    """Flatten (1, S_max, D) -> (1, S_max*D) ONCE at setup (contiguous, no copy
    in the hot path).  Kept in f32 so x + pe promotes exactly like torch."""
    return pe.reshape(1, -1)


# --------------------------------------------------------------------------
# Tiling / chip policy
# --------------------------------------------------------------------------
def _chip_profile():
    """(target_block_bytes, vmem_limit_bytes, prefer_even_column_blocks)."""
    kind = ""
    try:
        kind = jax.devices()[0].device_kind.lower()
    except Exception:
        pass
    if "v7" in kind:
        # 3.2 TB/s HBM: bigger blocks hide the fixed per-step overhead; raise
        # the scoped-VMEM cap (64 MiB physical) so double-buffered in/out +
        # the PRNG-bits temp fit comfortably.
        return 6 * 1024 * 1024, 48 << 20, True
    # v5e / v6e: 2 MiB blocks already sit at ~85% of HBM roofline and fit the
    # 16 / 32 MiB scoped-VMEM defaults (incl. the u32 bits temp), so leave the
    # limit alone.
    return 2 * 1024 * 1024, None, False


def _pick_tiles(B, F, x_dtype, target_block_bytes, prefer_even_cols):
    """Row tile over batch, lane-dense column tile over the flattened S*D axis."""
    itemsize = jnp.dtype(x_dtype).itemsize
    sub = max(8, 32 // itemsize)          # native sublane multiple: 8/16/32

    # Row (batch) tile: full batch unless B is a multiple of the sublane pack.
    if B % sub != 0:
        tr = B
    else:
        tr = sub
        for cand in (8 * sub, 4 * sub, 2 * sub):
            if B % cand == 0:
                tr = cand
                break

    # Column tile: always a multiple of 128 (lane-dense), bounded by the
    # per-generation block-byte target.  Ragged edges handled by a cdiv grid.
    f_pad = ((F + 127) // 128) * 128
    target_cols = max(128, target_block_bytes // max(1, tr * itemsize))
    tc = max(128, min((target_cols // 128) * 128, f_pad))
    if tc < f_pad:
        # Prefer an exact divisor of F (no partial edge block) when one exists.
        best = None
        c = 128
        while c <= tc:
            if F % c == 0:
                best = c
            c += 128
        if best is not None:
            tc = best
    if prefer_even_cols and F > tc and tc % 256 == 0 and pl.cdiv(F, tc) % 2 == 1:
        tc //= 2                           # even block count -> balanced TC shards
    return tr, tc


# --------------------------------------------------------------------------
# Forward wrapper
# --------------------------------------------------------------------------
def positional_encoding_forward(x, pe_flat, *, dropout_p: float, seed: int = 0):
    """x: (B, S, D); pe_flat: (1, S_max*D) f32 (from prepare_pe), S*D <= S_max*D.
    Returns dropout(x + pe[:, :S, :]) with torch's dtype promotion."""
    B, S, D = x.shape
    F = S * D
    if pe_flat.ndim == 3:                     # accept an un-flattened table too
        pe_flat = pe_flat.reshape(1, -1)
    assert pe_flat.shape[1] >= F, "PE table shorter than the input sequence"

    out_dtype = jnp.promote_types(x.dtype, pe_flat.dtype)   # torch: f32 buffer promotes
    if dropout_p >= 1.0:
        return jnp.zeros((B, S, D), dtype=out_dtype)

    x2 = x.reshape(B, F)                      # lane-dense layout, no data movement

    target_bytes, vmem_limit, prefer_even = _chip_profile()
    tr, tc = _pick_tiles(B, F, x.dtype, target_bytes, prefer_even)
    grid = (pl.cdiv(F, tc), pl.cdiv(B, tr))   # column axis outermost -> pe resident

    x_spec = pl.BlockSpec((tr, tc), lambda c, r, *_: (r, c))
    pe_spec = pl.BlockSpec((1, tc), lambda c, r, *_: (0, c))
    out_spec = pl.BlockSpec((tr, tc), lambda c, r, *_: (r, c))

    cparams = pltpu.CompilerParams(
        dimension_semantics=("parallel", "parallel"),
        vmem_limit_bytes=vmem_limit,
    )
    out_shape = jax.ShapeDtypeStruct((B, F), out_dtype)

    if dropout_p <= 0.0:
        out2 = pl.pallas_call(
            _pe_add_kernel,
            out_shape=out_shape,
            grid_spec=pltpu.PrefetchScalarGridSpec(
                num_scalar_prefetch=0, grid=grid,
                in_specs=[x_spec, pe_spec], out_specs=out_spec),
            compiler_params=cparams,
        )(x2, pe_flat)
        return out2.reshape(B, S, D)

    # Integer dropout threshold: keep iff uniform u32 bits >= round(p * 2^32).
    threshold = min(int(round(float(dropout_p) * (2.0 ** 32))), 2 ** 32 - 1)
    scale = 1.0 / (1.0 - float(dropout_p))

    if jax.default_backend() == "tpu":
        # TODO(synk): RNG stream differs from torch.nn.Dropout (stochastic op);
        # keep-probability / scaling semantics match exactly.
        kernel = functools.partial(_pe_add_dropout_kernel,
                                   threshold=threshold, scale=scale)
        seed_arr = jnp.asarray([seed], dtype=jnp.int32)
        out2 = pl.pallas_call(
            kernel,
            out_shape=out_shape,
            grid_spec=pltpu.PrefetchScalarGridSpec(
                num_scalar_prefetch=1,                    # seed -> SMEM
                grid=grid,
                in_specs=[x_spec, pe_spec], out_specs=out_spec),
            compiler_params=cparams,
        )(seed_arr, x2, pe_flat)
    else:
        # CPU / interpret fallback: TPU hardware PRNG primitives do not lower
        # here, so feed precomputed random bits through the same tiling.
        bits = jax.random.bits(jax.random.PRNGKey(seed), (B, F), dtype=jnp.uint32)
        kernel = functools.partial(_pe_add_bits_kernel,
                                   threshold=threshold, scale=scale)
        out2 = pl.pallas_call(
            kernel,
            out_shape=out_shape,
            grid_spec=pltpu.PrefetchScalarGridSpec(
                num_scalar_prefetch=0, grid=grid,
                in_specs=[x_spec, pe_spec, x_spec], out_specs=out_spec),
            compiler_params=cparams,
        )(x2, pe_flat, bits)

    return out2.reshape(B, S, D)


# --------------------------------------------------------------------------
# Module-style convenience wrapper (mirrors the torch module)
# --------------------------------------------------------------------------
class PositionalEncoding:
    def __init__(self, d_model: int, seq_len: int, dropout: float):
        self.dropout_p = float(dropout)
        self.pe = make_positional_encoding(d_model, seq_len)   # (1, S, D) f32
        self.pe_flat = prepare_pe(self.pe)                     # flattened once

    def __call__(self, x, *, seed: int = 0, train: bool = True):
        p = self.dropout_p if train else 0.0
        return positional_encoding_forward(x, self.pe_flat, dropout_p=p, seed=seed)


# --------------------------------------------------------------------------
# Test
# --------------------------------------------------------------------------
if __name__ == "__main__":
    batch, seq_len, d_model = 2, 8, 32
    dropout_p = 0.1

    key = jax.random.PRNGKey(0)
    x = jax.random.normal(key, (batch, seq_len, d_model), dtype=jnp.float32)

    module = PositionalEncoding(d_model, seq_len, dropout_p)

    out = module(x, seed=0, train=True)
    out = jax.block_until_ready(out)
    assert out.shape == (batch, seq_len, d_model)
    assert out.dtype == jnp.float32

    # Exact check against a pure-JAX reference with dropout disabled.
    out_nodrop = jax.block_until_ready(module(x, train=False))
    ref = x + module.pe[:, :seq_len, :]
    assert jnp.allclose(out_nodrop, ref, atol=1e-6), "mismatch vs reference"

    # Dropout sanity: each element is either 0 or (x + pe) / (1 - p).
    expected = ref / (1.0 - dropout_p)
    ok = jnp.isclose(out, 0.0) | jnp.isclose(out, expected, atol=1e-5)
    assert bool(jnp.all(ok)), "dropout output not in {0, scaled} set"

    print("KERNEL_OK")
</pallas_src>

<mosaic_0001>
module attributes {stable_mosaic.version = 11 : i64} {
  func.func @_pe_add_bits_kernel(%arg0: i32, %arg1: i32, %arg2: memref<2x256xf32, #tpu.memory_space<vmem>>, %arg3: memref<1x256xf32, #tpu.memory_space<vmem>>, %arg4: memref<2x256xi32, #tpu.memory_space<vmem>>, %arg5: memref<2x256xf32, #tpu.memory_space<vmem>>) attributes {dimension_semantics = [#tpu.dimension_semantics<parallel>, #tpu.dimension_semantics<parallel>], iteration_bounds = array<i64: 1, 1>, scalar_prefetch = 0 : i64, scratch_operands = 0 : i64, tpu.core_type = #tpu.core_type<tc>, window_params = [{transform_indices = @transform_0, window_bounds = array<i64: 2, 256>}, {transform_indices = @transform_1, window_bounds = array<i64: 1, 256>}, {transform_indices = @transform_2, window_bounds = array<i64: 2, 256>}, {transform_indices = @transform_3, window_bounds = array<i64: 2, 256>}]} {
    %c0 = arith.constant 0 : index
    %c0_0 = arith.constant 0 : index
    %0 = vector.load %arg2[%c0, %c0_0] : memref<2x256xf32, #tpu.memory_space<vmem>>, vector<2x256xf32>
    %c0_1 = arith.constant 0 : index
    %c0_2 = arith.constant 0 : index
    %1 = vector.load %arg3[%c0_1, %c0_2] : memref<1x256xf32, #tpu.memory_space<vmem>>, vector<1x256xf32>
    %2 = vector.broadcast %1 : vector<1x256xf32> to vector<2x256xf32>
    %3 = arith.addf %0, %2 : vector<2x256xf32>
    %c0_3 = arith.constant 0 : index
    %c0_4 = arith.constant 0 : index
    %4 = vector.load %arg4[%c0_3, %c0_4] : memref<2x256xi32, #tpu.memory_space<vmem>>, vector<2x256xi32>
    %c429496730_i32 = arith.constant 429496730 : i32
    %5 = vector.broadcast %c429496730_i32 : i32 to vector<2x256xi32>
    %6 = arith.cmpi uge, %4, %5 : vector<2x256xi32>
    %cst = arith.constant 1.11111116 : f32
    %7 = vector.broadcast %cst : f32 to vector<2x256xf32>
    %8 = arith.mulf %3, %7 : vector<2x256xf32>
    %cst_5 = arith.constant 0.000000e+00 : f32
    %9 = vector.broadcast %cst_5 : f32 to vector<2x256xf32>
    %10 = arith.select %6, %8, %9 : vector<2x256xi1>, vector<2x256xf32>
    %c0_6 = arith.constant 0 : index
    %c0_7 = arith.constant 0 : index
    %11 = vector.load %arg5[%c0_6, %c0_7] : memref<2x256xf32, #tpu.memory_space<vmem>>, vector<2x256xf32>
    tpu.vector_store %arg5[%c0_6, %c0_7], %10 {strides = array<i32>} : memref<2x256xf32, #tpu.memory_space<vmem>>, vector<2x256xf32>,
    return
  }
  func.func @transform_0(%arg0: i32, %arg1: i32) -> (i32, i32) {
    %c0_i32 = arith.constant 0 : i32
    return %arg1, %arg0 : i32, i32
  }
  func.func @transform_1(%arg0: i32, %arg1: i32) -> (i32, i32) {
    %c0_i32 = arith.constant 0 : i32
    %c0_i32_0 = arith.constant 0 : i32
    return %c0_i32, %arg0 : i32, i32
  }
  func.func @transform_2(%arg0: i32, %arg1: i32) -> (i32, i32) {
    %c0_i32 = arith.constant 0 : i32
    return %arg1, %arg0 : i32, i32
  }
  func.func @transform_3(%arg0: i32, %arg1: i32) -> (i32, i32) {
    %c0_i32 = arith.constant 0 : i32
    return %arg1, %arg0 : i32, i32
  }
}

</mosaic_0001>

<llo_original>
// kernel: tpu_custom_call.1
$region0: #{tpu_custom_call.1}
  #allocation0 [shape = 'u32[]', space=smem, size = 0x4, offset = 0x4, fixed_abs, tag = 'smem constant byte address 0x4 - core index']
  #allocation1 [shape = 'u32[144,128]{1,0:T(1,128)}', space=vmem, size = 0x12000, scoped, tag = 'internal scratch']
  %s0 = inlined_call_operand.hbm [shape: f32[2,256], index: 0, kind: input, shape index: {}]
  %s1 = inlined_call_operand.vmem [shape: f32[1,256], index: 1, kind: input, shape index: {}]
  %s2 = inlined_call_operand.vmem [shape: u32[2,256], index: 2, kind: input, shape index: {}]
  %s3 = inlined_call_operand.hbm [shape: f32[2,256], index: 3, kind: output, shape index: {}]
  %s4 = sld [smem:[#allocation0]]
  $region26: #{tpu_custom_call.1} parent=0
    _
  %s6 = ssub.s32 1, %s4
  %s7 = scalar_select 0, %s6, %s4
  $region1: #{tpu_custom_call.1} parent=0
    #allocation2 [shape = 'u8[2048]{0}', space=vmem, size = 0x800, scoped, tag = 'input window, operand 0, single buffered']
    #allocation3 [shape = 's32[1]{0}', space=sflag, size = 0x4, scoped, tag = 'scoped memory for tpu_custom_call.1']
    #allocation4 [shape = 's32[1]{0}', space=sflag, size = 0x4, scoped, tag = 'scoped memory for tpu_custom_call.1']
    #allocation5 [shape = 'u8[2048]{0}', space=vmem, size = 0x800, scoped, tag = 'output window, operand 0, single buffered']
    %8 = vsyncpa [#allocation3], 0
    %9 = vsyncpa [#allocation4], 0
    // Predicated region
    $region2: #{tpu_custom_call.1} parent=1 // pred_check
      _
    $region3: #{tpu_custom_call.1} parent=1 // pred_check_branch
      %11 = sbr.rel (0) target = $region5
    $region4: #{tpu_custom_call.1} parent=1 // pred_region
      %s13 = ssub.s32 64, 64
      %14 = vsyncadd [#allocation3], %s13
      %s16 = sshll.u32 [#allocation2], 4
      %s17 = int_to_ptr.vmem [resolvable:$true] %s16
      %19 = dma.hbm_to_vmem [thread:$0]  %s0, 64, %s17, [#allocation3]
    $region5: #{tpu_custom_call.1} parent=1 // pred_fallthru
      _
    // Predicated region
    $region6: #{tpu_custom_call.1} parent=1 // pred_check
      _
    $region7: #{tpu_custom_call.1} parent=1 // pred_check_branch
      %21 = sbr.rel (0) target = $region9
    $region8: #{tpu_custom_call.1} parent=1 // pred_region
      _
    $region9: #{tpu_custom_call.1} parent=1 // pred_fallthru
      _
    // Predicated region
    $region10: #{tpu_custom_call.1} parent=1 // pred_check
      _
    $region11: #{tpu_custom_call.1} parent=1 // pred_check_branch
      %23 = sbr.rel (0) target = $region13
    $region12: #{tpu_custom_call.1} parent=1 // pred_region
      _
    $region13: #{tpu_custom_call.1} parent=1 // pred_fallthru
      _
    // Predicated region
    $region14: #{tpu_custom_call.1} parent=1 // pred_check
      _
    $region15: #{tpu_custom_call.1} parent=1 // pred_check_branch
      %25 = sbr.rel (0) target = $region17
    $region16: #{tpu_custom_call.1} parent=1 // pred_region
      %26 = dma.done [#allocation3], 64
    $region17: #{tpu_custom_call.1} parent=1 // pred_fallthru
      _
    %v27 = vld [vmem:[#allocation2] sm:$0xf]
    %v28 = vld [vmem:[%s1] sm:$0x3]
    %v30 = vlaneseq
    %v31 = vshrl.u32 %v30, 7
    %v32 = vsub.s32 0, %v31
    %v33 = vrot.slane %v28, %v32
    %v34 = vlaneseq
    %v35 = vshrl.u32 %v34, 7
    %v36 = vsub.s32 1, %v35
    %v37 = vrot.slane %v28, %v36
    %v38 = vcombine.low %v33, %v37
    %v40 = vunpack.c.l.s4 1983009808
    %v41 = vunpack.c.0.s8 %v40
    %v42 = vlaneseq
    %v43 = vshrl.u32 %v42, 7
    %v44 = vsub.s32 %v41, %v43
    %v45 = vrot.slane %v38, %v44
    %v47 = vadd.f32 %v27, %v45
    %v48 = vld [vmem:[%s2] sm:$0xf]
    %vm49 = vcmp.ge.u32.totalorder %v48, 429496730
    %v50 = vmul.f32 %v47, 1.1111112
    %v51 = vsel %vm49, %v50, 0.0
    %52 = vst [vmem:[#allocation5] sm:$0xf] %v51
    // Predicated region
    $region18: #{tpu_custom_call.1} parent=1 // pred_check
      _
    $region19: #{tpu_custom_call.1} parent=1 // pred_check_branch
      %54 = sbr.rel (0) target = $region21
    $region20: #{tpu_custom_call.1} parent=1 // pred_region
      %s56 = ssub.s32 64, 64
      %57 = vsyncadd [#allocation4], %s56
      %s59 = sshll.u32 [#allocation5], 4
      %s60 = int_to_ptr.vmem [resolvable:$true] %s59
      %62 = dma.vmem_to_hbm [thread:$0]  %s60, 64, %s3, [#allocation4]
    $region21: #{tpu_custom_call.1} parent=1 // pred_fallthru
      _
    // Predicated region
    $region22: #{tpu_custom_call.1} parent=1 // pred_check
      _
    $region23: #{tpu_custom_call.1} parent=1 // pred_check_branch
      %64 = sbr.rel (0) target = $region25
    $region24: #{tpu_custom_call.1} parent=1 // pred_region
      %65 = dma.done [#allocation4], 64
    $region25: #{tpu_custom_call.1} parent=1 // pred_fallthru
      _
    %66 = vsyncpa [#allocation3], 1
    %67 = vsyncpa [#allocation4], 1

</llo_original>
